<compile_context>
chip_gen: v5e
topology: v5e:2x2
jax: 0.10.0
libtpu: 0.0.40
codegen_flags: <defaults>
</compile_context>

<pallas_src>
import math

import jax
import jax.numpy as jnp
from jax.experimental import pallas as pl
from jax.experimental.pallas import tpu as pltpu

LANES = 128


def _cdiv(a, b):
    return -(-a // b)


def _round_up(a, b):
    return _cdiv(a, b) * b


# ----------------------------------------------------------------------------
# Generation detection (block sizing / core-parallel choice differ per chip)
# ----------------------------------------------------------------------------
def _device_kind():
    try:
        return jax.devices()[0].device_kind.lower()
    except Exception:
        return ""


_KIND = _device_kind()
_IS_V7X = "v7" in _KIND
_IS_V5E = ("v5e" in _KIND) or ("v5 lite" in _KIND) or ("v5lite" in _KIND)

# Per-stream block cap:
#   v5e / v6e : 2 MiB/stream -> 3 streams x 2 buffers = 12 MiB in flight
#               (fits v5e's 16 MiB scoped-VMEM default even without the explicit limit)
#   v7x       : 4 MiB/stream -> 24 MiB in flight (< 32 MiB scoped / 64 MiB physical);
#               at 3.2 TB/s HBM, smaller blocks are per-grid-step-overhead bound.
_BLOCK_CAP_BYTES = (4 << 20) if _IS_V7X else (2 << 20)


def _vmem_limit_bytes(block_bytes):
    in_flight = 6 * block_bytes  # 3 streams (shadow-in, param-in, out) x double buffer
    cap = (40 << 20) if _IS_V7X else (64 << 20)  # headroom under v7x's 64 MiB physical
    return int(min(max(in_flight + (8 << 20), 16 << 20), cap))


def _grid_semantics(grid_n):
    # Measured: "parallel" vs "arbitrary" is a codegen no-op; only CORE_PARALLEL
    # actually splits a grid axis across v7x's two TensorCores.
    if _IS_V7X and grid_n >= 2:
        return (pltpu.CORE_PARALLEL,)
    return (pltpu.PARALLEL,)


def _plan_layout(n_elems, dtype):
    """Pick (rows, block_rows, grid_n) for a lane-dense (rows, 128) slab of `dtype`."""
    itemsize = dtype.itemsize
    granule = max(8, 32 // itemsize)  # sublane packing: 8 for f32, 16 for bf16, 32 for int8
    cap_rows = max(granule, (_BLOCK_CAP_BYTES // (LANES * itemsize)) // granule * granule)
    rows_needed = _round_up(_cdiv(max(n_elems, 1), LANES), granule)
    if rows_needed <= cap_rows:
        # Slab fits in a single block: block_rows == rows, no wasted padded rows.
        return rows_needed, rows_needed, 1
    grid_n = _cdiv(rows_needed, cap_rows)
    if _IS_V7X and grid_n % 2:
        grid_n += 1  # even split across the two TensorCores
    block_rows = _round_up(_cdiv(rows_needed, grid_n), granule)
    return block_rows * grid_n, block_rows, grid_n


# ----------------------------------------------------------------------------
# Pallas kernel: out = shadow - one_minus_decay * (shadow - param)
# ----------------------------------------------------------------------------
def ema_update_kernel(omd_ref, shadow_ref, param_ref, out_ref):
    # omd_ref lives in SMEM: scalar one_minus_decay, shape (1, 1)
    omd = omd_ref[0, 0]
    s = shadow_ref[...].astype(jnp.float32)
    p = param_ref[...].astype(jnp.float32)
    # TODO(synk): for bf16 shadows an optional pltpu.stochastic_round would remove
    # rounding bias; kept deterministic round-to-nearest here to match the reference.
    out_ref[...] = (s - omd * (s - p)).astype(out_ref.dtype)


def ema_update_flat(one_minus_decay, shadow_slab, param_slab, *, block_rows, grid_n):
    """EMA elementwise update on a lane-dense (rows, 128) slab (shadow dtype == param dtype)."""
    rows, lanes = shadow_slab.shape
    assert lanes == LANES and rows == block_rows * grid_n
    itemsize = shadow_slab.dtype.itemsize
    block_bytes = block_rows * LANES * itemsize
    n_elems = rows * LANES

    omd = jnp.asarray(one_minus_decay, dtype=jnp.float32).reshape(1, 1)

    cost = pl.CostEstimate(
        flops=3 * n_elems,                       # sub, mul, sub per element
        transcendentals=0,
        bytes_accessed=3 * n_elems * itemsize + 8,
    )

    return pl.pallas_call(
        ema_update_kernel,
        out_shape=jax.ShapeDtypeStruct((rows, LANES), shadow_slab.dtype),
        grid_spec=pltpu.PrefetchScalarGridSpec(
            num_scalar_prefetch=0,
            grid=(grid_n,),
            in_specs=[
                pl.BlockSpec(memory_space=pltpu.MemorySpace.SMEM),    # omd scalar
                pl.BlockSpec((block_rows, LANES), lambda i: (i, 0)),  # shadow
                pl.BlockSpec((block_rows, LANES), lambda i: (i, 0)),  # params
            ],
            out_specs=pl.BlockSpec((block_rows, LANES), lambda i: (i, 0)),
        ),
        input_output_aliases={1: 0},  # shadow slab updated in place
        compiler_params=pltpu.CompilerParams(
            dimension_semantics=_grid_semantics(grid_n),
            vmem_limit_bytes=_vmem_limit_bytes(block_bytes),
        ),
        cost_estimate=cost,
    )(omd, shadow_slab, param_slab)


# ----------------------------------------------------------------------------
# EMA state container (plain-JAX glue; hot path is the Pallas kernel above)
# ----------------------------------------------------------------------------
class EMAState:
    def __init__(self, params, decay=0.9999, use_num_updates=True):
        if decay < 0.0 or decay > 1.0:
            raise ValueError("Decay must be between 0 and 1")
        self.decay = jnp.float32(decay)
        self.num_updates = jnp.int32(0) if use_num_updates else jnp.int32(-1)

        # --- static metadata: group params by dtype; each group is one slab -----
        self._keys = sorted(params)
        groups_keys = {}
        group_dtype = {}
        for k in self._keys:
            dt = jnp.asarray(params[k]).dtype
            gname = dt.name
            groups_keys.setdefault(gname, []).append(k)
            group_dtype[gname] = dt
        self._group_order = tuple(sorted(groups_keys))

        self._groups = {}
        for g in self._group_order:
            meta, off = {}, 0
            for k in groups_keys[g]:
                shape = tuple(jnp.asarray(params[k]).shape)
                size = int(math.prod(shape)) if shape else 1
                meta[k] = (off, size, shape)
                off += size
            rows, block_rows, grid_n = _plan_layout(off, group_dtype[g])
            self._groups[g] = dict(keys=tuple(groups_keys[g]), meta=meta, n=off,
                                   dtype=group_dtype[g], rows=rows,
                                   block_rows=block_rows, grid_n=grid_n)

        # --- shadow slabs = clone of current params (flattened exactly once) ----
        self.shadow_slabs = self.params_to_slabs(params)

        # collected params (for store()/restore())
        self.collected = {k: jnp.asarray(params[k]) for k in self._keys}

        # --- build the jitted step once (closes over static layout) -------------
        group_order = self._group_order
        layouts = {g: (self._groups[g]["block_rows"], self._groups[g]["grid_n"])
                   for g in group_order}

        def step(decay, num_updates, shadow_slabs, param_slabs):
            # decay schedule; jnp.where covers use_num_updates=False (num_updates=-1)
            nu_new = jnp.where(num_updates >= 0, num_updates + 1, num_updates)
            nu_f = nu_new.astype(jnp.float32)
            sched = (1.0 + nu_f) / (10.0 + nu_f)
            decay_eff = jnp.where(num_updates >= 0, jnp.minimum(decay, sched), decay)
            omd = jnp.float32(1.0) - decay_eff
            new_shadows = {}
            for g in group_order:
                br, gn = layouts[g]
                new_shadows[g] = ema_update_flat(
                    omd, shadow_slabs[g], param_slabs[g], block_rows=br, grid_n=gn)
            return nu_new, new_shadows

        self._step = jax.jit(step, donate_argnums=(2,))

    # --- one-time conversion of a param dict into lane-dense slabs -------------
    def params_to_slabs(self, params):
        """Convert a param dict into per-dtype (rows, 128) slabs.

        In a real trainer, keep the live params permanently in this layout
        (flatten once) so forward() moves no extra HBM bytes per step.
        """
        slabs = {}
        for g in self._group_order:
            grp = self._groups[g]
            flat = jnp.concatenate(
                [jnp.ravel(jnp.asarray(params[k])).astype(grp["dtype"])
                 for k in grp["keys"]])
            pad = grp["rows"] * LANES - grp["n"]
            slabs[g] = jnp.pad(flat, (0, pad)).reshape(grp["rows"], LANES)
        return slabs

    # --- forward: EMA update (fast path: params already in slab layout) --------
    def forward(self, param_slabs):
        self.num_updates, self.shadow_slabs = self._step(
            self.decay, self.num_updates, self.shadow_slabs, param_slabs)

    def forward_from_dict(self, params):
        # TODO(synk): slow convenience path — re-flattening every step re-adds ~2x
        # param HBM traffic; prefer keeping live params in slab layout + forward().
        self.forward(self.params_to_slabs(params))

    # --- lazy unflatten of the shadow slabs -------------------------------------
    def copy_to(self):
        out = {}
        for g in self._group_order:
            grp = self._groups[g]
            flat = self.shadow_slabs[g].reshape(-1)
            for k in grp["keys"]:
                off, size, shape = grp["meta"][k]
                out[k] = flat[off:off + size].reshape(shape)
        return out

    def store(self, params):
        self.collected = {k: jnp.asarray(params[k]) for k in self._keys}

    def restore(self):
        return dict(self.collected)


# ----------------------------------------------------------------------------
# Demo / self-check
# ----------------------------------------------------------------------------
if __name__ == "__main__":
    key = jax.random.PRNGKey(0)
    ks = jax.random.split(key, 10)

    # Synthetic "model" parameters (deterministic init): conv + linear (f32) and a
    # bf16 embedding to exercise the per-dtype slab grouping.
    init_params = {
        "conv.weight": jax.random.normal(ks[0], (4, 4, 3, 3), jnp.float32) * 0.1,
        "conv.bias": jax.random.normal(ks[1], (4,), jnp.float32) * 0.1,
        "linear.weight": jax.random.normal(ks[2], (32, 64), jnp.float32) * 0.1,
        "linear.bias": jax.random.normal(ks[3], (32,), jnp.float32) * 0.1,
        "embed.weight": (jax.random.normal(ks[4], (16, 32), jnp.float32) * 0.1
                         ).astype(jnp.bfloat16),
    }

    ema = EMAState(init_params, decay=0.9999, use_num_updates=True)

    # Simulate optimizer-updated "current" model params (perturbed init).
    noise_keys = {"conv.weight": ks[5], "conv.bias": ks[6],
                  "linear.weight": ks[7], "linear.bias": ks[8], "embed.weight": ks[9]}
    cur_params = {}
    for k, p in init_params.items():
        n = 0.01 * jax.random.normal(noise_keys[k], p.shape, jnp.float32)
        cur_params[k] = (p.astype(jnp.float32) + n).astype(p.dtype)

    # One-time conversion to slab layout (a real trainer keeps params here).
    cur_slabs = ema.params_to_slabs(cur_params)

    # Two EMA steps against the same current params (exercises donation/in-place).
    ema.forward(cur_slabs)
    ema.forward(cur_slabs)
    jax.block_until_ready(ema.shadow_slabs)

    new_shadow = ema.copy_to()

    # Pure-JAX reference of the exact PyTorch semantics (num_updates: 0 -> 1 -> 2).
    def ref_update(s, p, nu):
        d = min(0.9999, (1.0 + nu) / (10.0 + nu))
        omd = 1.0 - d
        s32 = s.astype(jnp.float32)
        p32 = p.astype(jnp.float32)
        return (s32 - omd * (s32 - p32)).astype(s.dtype)

    ok = True
    for k in init_params:
        expect = ref_update(ref_update(init_params[k], cur_params[k], 1.0),
                            cur_params[k], 2.0)
        got = new_shadow[k]
        tol = 1e-6 if init_params[k].dtype == jnp.float32 else 1e-2
        ok &= bool(jnp.allclose(got.astype(jnp.float32), expect.astype(jnp.float32),
                                atol=tol, rtol=tol))
        ok &= (got.dtype == init_params[k].dtype) and (got.shape == init_params[k].shape)

    print("KERNEL_OK" if ok else "MISMATCH")
</pallas_src>

<mosaic_0001>
module attributes {stable_mosaic.version = 11 : i64} {
  func.func @ema_update_kernel(%arg0: i32, %arg1: memref<1x1xf32, #tpu.memory_space<smem>>, %arg2: memref<16x128xbf16, #tpu.memory_space<vmem>>, %arg3: memref<16x128xbf16, #tpu.memory_space<vmem>>, %arg4: memref<16x128xbf16, #tpu.memory_space<vmem>>) attributes {dimension_semantics = [#tpu.dimension_semantics<parallel>], iteration_bounds = array<i64: 1>, scalar_prefetch = 0 : i64, scratch_operands = 0 : i64, tpu.core_type = #tpu.core_type<tc>, window_params = [{transform_indices = @transform_0, window_bounds = array<i64: 1, 1>}, {transform_indices = @transform_1, window_bounds = array<i64: 16, 128>}, {transform_indices = @transform_2, window_bounds = array<i64: 16, 128>}, {transform_indices = @transform_3, window_bounds = array<i64: 16, 128>}]} {
    %c0 = arith.constant 0 : index
    %c0_0 = arith.constant 0 : index
    %0 = memref.load %arg1[%c0, %c0_0] : memref<1x1xf32, #tpu.memory_space<smem>>
    %c0_1 = arith.constant 0 : index
    %c0_2 = arith.constant 0 : index
    %1 = vector.load %arg2[%c0_1, %c0_2] : memref<16x128xbf16, #tpu.memory_space<vmem>>, vector<16x128xbf16>
    %2 = arith.extf %1 : vector<16x128xbf16> to vector<16x128xf32>
    %c0_3 = arith.constant 0 : index
    %c0_4 = arith.constant 0 : index
    %3 = vector.load %arg3[%c0_3, %c0_4] : memref<16x128xbf16, #tpu.memory_space<vmem>>, vector<16x128xbf16>
    %4 = arith.extf %3 : vector<16x128xbf16> to vector<16x128xf32>
    %5 = arith.subf %2, %4 : vector<16x128xf32>
    %6 = vector.broadcast %0 : f32 to vector<16x128xf32>
    %7 = arith.mulf %6, %5 : vector<16x128xf32>
    %8 = arith.subf %2, %7 : vector<16x128xf32>
    %9 = arith.truncf %8 : vector<16x128xf32> to vector<16x128xbf16>
    %c0_5 = arith.constant 0 : index
    %c0_6 = arith.constant 0 : index
    %10 = vector.load %arg4[%c0_5, %c0_6] : memref<16x128xbf16, #tpu.memory_space<vmem>>, vector<16x128xbf16>
    tpu.vector_store %arg4[%c0_5, %c0_6], %9 {strides = array<i32>} : memref<16x128xbf16, #tpu.memory_space<vmem>>, vector<16x128xbf16>,
    return
  }
  func.func @transform_0(%arg0: i32) -> (i32, i32) {
    %c0_i32 = arith.constant 0 : i32
    %c0_i32_0 = arith.constant 0 : i32
    %c0_i32_1 = arith.constant 0 : i32
    return %c0_i32, %c0_i32_0 : i32, i32
  }
  func.func @transform_1(%arg0: i32) -> (i32, i32) {
    %c0_i32 = arith.constant 0 : i32
    %c0_i32_0 = arith.constant 0 : i32
    return %arg0, %c0_i32 : i32, i32
  }
  func.func @transform_2(%arg0: i32) -> (i32, i32) {
    %c0_i32 = arith.constant 0 : i32
    %c0_i32_0 = arith.constant 0 : i32
    return %arg0, %c0_i32 : i32, i32
  }
  func.func @transform_3(%arg0: i32) -> (i32, i32) {
    %c0_i32 = arith.constant 0 : i32
    %c0_i32_0 = arith.constant 0 : i32
    return %arg0, %c0_i32 : i32, i32
  }
}

module attributes {stable_mosaic.version = 11 : i64} {
  func.func @ema_update_kernel(%arg0: i32, %arg1: memref<1x1xf32, #tpu.memory_space<smem>>, %arg2: memref<24x128xf32, #tpu.memory_space<vmem>>, %arg3: memref<24x128xf32, #tpu.memory_space<vmem>>, %arg4: memref<24x128xf32, #tpu.memory_space<vmem>>) attributes {dimension_semantics = [#tpu.dimension_semantics<parallel>], iteration_bounds = array<i64: 1>, scalar_prefetch = 0 : i64, scratch_operands = 0 : i64, tpu.core_type = #tpu.core_type<tc>, window_params = [{transform_indices = @transform_0, window_bounds = array<i64: 1, 1>}, {transform_indices = @transform_1, window_bounds = array<i64: 24, 128>}, {transform_indices = @transform_2, window_bounds = array<i64: 24, 128>}, {transform_indices = @transform_3, window_bounds = array<i64: 24, 128>}]} {
    %c0 = arith.constant 0 : index
    %c0_0 = arith.constant 0 : index
    %0 = memref.load %arg1[%c0, %c0_0] : memref<1x1xf32, #tpu.memory_space<smem>>
    %c0_1 = arith.constant 0 : index
    %c0_2 = arith.constant 0 : index
    %1 = vector.load %arg2[%c0_1, %c0_2] : memref<24x128xf32, #tpu.memory_space<vmem>>, vector<24x128xf32>
    %c0_3 = arith.constant 0 : index
    %c0_4 = arith.constant 0 : index
    %2 = vector.load %arg3[%c0_3, %c0_4] : memref<24x128xf32, #tpu.memory_space<vmem>>, vector<24x128xf32>
    %3 = arith.subf %1, %2 : vector<24x128xf32>
    %4 = vector.broadcast %0 : f32 to vector<24x128xf32>
    %5 = arith.mulf %4, %3 : vector<24x128xf32>
    %6 = arith.subf %1, %5 : vector<24x128xf32>
    %c0_5 = arith.constant 0 : index
    %c0_6 = arith.constant 0 : index
    %7 = vector.load %arg4[%c0_5, %c0_6] : memref<24x128xf32, #tpu.memory_space<vmem>>, vector<24x128xf32>
    tpu.vector_store %arg4[%c0_5, %c0_6], %6 {strides = array<i32>} : memref<24x128xf32, #tpu.memory_space<vmem>>, vector<24x128xf32>,
    return
  }
  func.func @transform_0(%arg0: i32) -> (i32, i32) {
    %c0_i32 = arith.constant 0 : i32
    %c0_i32_0 = arith.constant 0 : i32
    %c0_i32_1 = arith.constant 0 : i32
    return %c0_i32, %c0_i32_0 : i32, i32
  }
  func.func @transform_1(%arg0: i32) -> (i32, i32) {
    %c0_i32 = arith.constant 0 : i32
    %c0_i32_0 = arith.constant 0 : i32
    return %arg0, %c0_i32 : i32, i32
  }
  func.func @transform_2(%arg0: i32) -> (i32, i32) {
    %c0_i32 = arith.constant 0 : i32
    %c0_i32_0 = arith.constant 0 : i32
    return %arg0, %c0_i32 : i32, i32
  }
  func.func @transform_3(%arg0: i32) -> (i32, i32) {
    %c0_i32 = arith.constant 0 : i32
    %c0_i32_0 = arith.constant 0 : i32
    return %arg0, %c0_i32 : i32, i32
  }
}

</mosaic_0001>

<llo_original>
// kernel: step.3
$region0: #{step.3}
  #allocation0 [shape = 'u32[]', space=smem, size = 0x4, offset = 0x4, fixed_abs, tag = 'smem constant byte address 0x4 - core index']
  #allocation1 [shape = 'u32[72,128]{1,0:T(1,128)}', space=vmem, size = 0x9000, scoped, tag = 'internal scratch']
  #allocation2 [shape = 'f32[1,1]{1,0:T(1,128)S(6)}', space=smem, size = 0x200, scoped, tag = 'scoped memory for step.3']
  %s0 = inlined_call_operand.<no memory space> [shape: f32[1,1], index: 0, kind: input, shape index: {}]
  %s1 = inlined_call_operand.vmem [shape: f32[24,128], index: 1, kind: input, shape index: {}, may-alias: {1,3}]
  %s2 = inlined_call_operand.vmem [shape: f32[24,128], index: 2, kind: input, shape index: {}]
  %s3 = inlined_call_operand.vmem [shape: f32[24,128], index: 3, kind: output, shape index: {}, may-alias: {1,3}]
  %s4 = sld [smem:[#allocation0]]
  $region22: #{step.3} parent=0
    _
  %s6 = ssub.s32 1, %s4
  %s7 = scalar_select 0, %s6, %s4
  %8 = sst [smem:[#allocation2]] %s0
  // Predicated region
  $region2: #{step.3} parent=0 // pred_check
    _
  $region3: #{step.3} parent=0 // pred_check_branch
    %10 = sbr.rel (0) target = $region5
  $region4: #{step.3} parent=0 // pred_region
    _
  $region5: #{step.3} parent=0 // pred_fallthru
    _
  // Predicated region
  $region6: #{step.3} parent=0 // pred_check
    _
  $region7: #{step.3} parent=0 // pred_check_branch
    %12 = sbr.rel (0) target = $region9
  $region8: #{step.3} parent=0 // pred_region
    _
  $region9: #{step.3} parent=0 // pred_fallthru
    _
  // Predicated region
  $region10: #{step.3} parent=0 // pred_check
    _
  $region11: #{step.3} parent=0 // pred_check_branch
    %14 = sbr.rel (0) target = $region13
  $region12: #{step.3} parent=0 // pred_region
    _
  $region13: #{step.3} parent=0 // pred_fallthru
    _
  %s15 = sld [smem:[#allocation2]]
  %v16 = vld [vmem:[%s1] sm:$0xff]
  %v17 = vld [vmem:[%s1 + $0x8] sm:$0xff]
  %v18 = vld [vmem:[%s1 + $0x10] sm:$0xff]
  %v19 = vld [vmem:[%s2] sm:$0xff]
  %v20 = vld [vmem:[%s2 + $0x8] sm:$0xff]
  %v21 = vld [vmem:[%s2 + $0x10] sm:$0xff]
  %v22 = vsub.f32 %v16, %v19
  %v23 = vsub.f32 %v17, %v20
  %v24 = vsub.f32 %v18, %v21
  %v25 = vstv %s15
  %v26 = vmul.f32 %v25, %v22
  %v27 = vmul.f32 %v25, %v23
  %v28 = vmul.f32 %v25, %v24
  %v29 = vsub.f32 %v16, %v26
  %v30 = vsub.f32 %v17, %v27
  %v31 = vsub.f32 %v18, %v28
  %32 = vst [vmem:[%s3] sm:$0xff] %v29
  %33 = vst [vmem:[%s3 + $0x8] sm:$0xff] %v30
  %34 = vst [vmem:[%s3 + $0x10] sm:$0xff] %v31
  // Predicated region
  $region14: #{step.3} parent=0 // pred_check
    _
  $region15: #{step.3} parent=0 // pred_check_branch
    %36 = sbr.rel (0) target = $region17
  $region16: #{step.3} parent=0 // pred_region
    _
  $region17: #{step.3} parent=0 // pred_fallthru
    _
  // Predicated region
  $region18: #{step.3} parent=0 // pred_check
    _
  $region19: #{step.3} parent=0 // pred_check_branch
    %38 = sbr.rel (0) target = $region21
  $region20: #{step.3} parent=0 // pred_region
    _
  $region21: #{step.3} parent=0 // pred_fallthru
    _

// kernel: step.2
$region0: #{step.2}
  #allocation0 [shape = 'u32[]', space=smem, size = 0x4, offset = 0x4, fixed_abs, tag = 'smem constant byte address 0x4 - core index']
  #allocation1 [shape = 'u32[72,128]{1,0:T(1,128)}', space=vmem, size = 0x9000, scoped, tag = 'internal scratch']
  #allocation2 [shape = 'f32[1,1]{1,0:T(1,128)S(6)}', space=smem, size = 0x200, scoped, tag = 'scoped memory for step.2']
  %s0 = inlined_call_operand.<no memory space> [shape: f32[1,1], index: 0, kind: input, shape index: {}]
  %s1 = inlined_call_operand.hbm [shape: bf16[16,128], index: 1, kind: input, shape index: {}, may-alias: {1,3}]
  %s2 = inlined_call_operand.vmem [shape: bf16[16,128], index: 2, kind: input, shape index: {}]
  %s3 = inlined_call_operand.hbm [shape: bf16[16,128], index: 3, kind: output, shape index: {}, may-alias: {1,3}]
  %s4 = sld [smem:[#allocation0]]
  $region26: #{step.2} parent=0
    _
  %s6 = ssub.s32 1, %s4
  %s7 = scalar_select 0, %s6, %s4
  %8 = sst [smem:[#allocation2]] %s0
  $region1: #{step.2} parent=0
    #allocation3 [shape = 'u8[4096]{0}', space=vmem, size = 0x1000, scoped, tag = 'input window, operand 1, single buffered']
    #allocation4 [shape = 's32[1]{0}', space=sflag, size = 0x4, scoped, tag = 'scoped memory for step.2']
    #allocation5 [shape = 's32[1]{0}', space=sflag, size = 0x4, scoped, tag = 'scoped memory for step.2']
    #allocation6 [shape = 'u8[4096]{0}', space=vmem, size = 0x1000, scoped, tag = 'output window, operand 0, single buffered']
    %9 = vsyncpa [#allocation4], 0
    %10 = vsyncpa [#allocation5], 0
    // Predicated region
    $region2: #{step.2} parent=1 // pred_check
      _
    $region3: #{step.2} parent=1 // pred_check_branch
      %12 = sbr.rel (0) target = $region5
    $region4: #{step.2} parent=1 // pred_region
      _
    $region5: #{step.2} parent=1 // pred_fallthru
      _
    // Predicated region
    $region6: #{step.2} parent=1 // pred_check
      _
    $region7: #{step.2} parent=1 // pred_check_branch
      %14 = sbr.rel (0) target = $region9
    $region8: #{step.2} parent=1 // pred_region
      %16 = vsyncadd [#allocation4], 0
      %s17 = sshll.u32 %s1, 4
      %s18 = int_to_ptr.hbm [resolvable:$true] %s17
      %s19 = sshll.u32 [#allocation3], 4
      %s20 = int_to_ptr.vmem [resolvable:$true] %s19
      %25 = dma.hbm_to_vmem [thread:$0]  %s18, 128, %s20, [#allocation4], 64, 64, 4
    $region9: #{step.2} parent=1 // pred_fallthru
      _
    // Predicated region
    $region10: #{step.2} parent=1 // pred_check
      _
    $region11: #{step.2} parent=1 // pred_check_branch
      %27 = sbr.rel (0) target = $region13
    $region12: #{step.2} parent=1 // pred_region
      _
    $region13: #{step.2} parent=1 // pred_fallthru
      _
    // Predicated region
    $region14: #{step.2} parent=1 // pred_check
      _
    $region15: #{step.2} parent=1 // pred_check_branch
      %29 = sbr.rel (0) target = $region17
    $region16: #{step.2} parent=1 // pred_region
      %31 = dma.done [#allocation4], 128
    $region17: #{step.2} parent=1 // pred_fallthru
      _
    %s32 = sld [smem:[#allocation2]]
    %v33 = vld [vmem:[#allocation3] sm:$0xf]
    %v34 = vld [vmem:[#allocation3 + $0x4] sm:$0xf]
    %v35 = vunpack.c.l.bf16 %v33
    %v36 = vunpack.c.l.bf16 %v34
    %v37 = vld [vmem:[%s2] sm:$0xf]
    %v38 = vld [vmem:[%s2 + $0x4] sm:$0xf]
    %v39 = vunpack.c.l.bf16 %v37
    %v40 = vunpack.c.l.bf16 %v38
    %v41 = vsub.f32 %v35, %v39
    %v42 = vsub.f32 %v36, %v40
    %v43 = vstv %s32
    %v44 = vmul.f32 %v43, %v41
    %v45 = vmul.f32 %v43, %v42
    %v46 = vsub.f32 %v35, %v44
    %v47 = vsub.f32 %v36, %v45
    %v48 = vpack.c.bf16 %v46, %v46
    %v49 = vpack.c.bf16 %v47, %v47
    %50 = vst [vmem:[#allocation6] sm:$0xf] %v48
    %51 = vst [vmem:[#allocation6 + $0x4] sm:$0xf] %v49
    // Predicated region
    $region18: #{step.2} parent=1 // pred_check
      _
    $region19: #{step.2} parent=1 // pred_check_branch
      %53 = sbr.rel (0) target = $region21
    $region20: #{step.2} parent=1 // pred_region
      %55 = vsyncadd [#allocation5], 0
      %s56 = sshll.u32 [#allocation6], 4
      %s57 = int_to_ptr.vmem [resolvable:$true] %s56
      %s58 = sshll.u32 %s3, 4
      %s59 = int_to_ptr.hbm [resolvable:$true] %s58
      %64 = dma.vmem_to_hbm [thread:$0]  %s57, 128, %s59, [#allocation5], 64, 64, 4
    $region21: #{step.2} parent=1 // pred_fallthru
      _
    // Predicated region
    $region22: #{step.2} parent=1 // pred_check
      _
    $region23: #{step.2} parent=1 // pred_check_branch
      %66 = sbr.rel (0) target = $region25
    $region24: #{step.2} parent=1 // pred_region
      %68 = dma.done [#allocation5], 128
    $region25: #{step.2} parent=1 // pred_fallthru
      _
    %69 = vsyncpa [#allocation4], 1
    %70 = vsyncpa [#allocation5], 1

</llo_original>
